<compile_context>
chip_gen: v6e
topology: v6e:2x2x1
jax: 0.10.0
libtpu: 0.0.40
codegen_flags: <defaults>
</compile_context>

<pallas_src>
import jax
import jax.numpy as jnp
from jax.experimental import pallas as pl
from jax.experimental.pallas import tpu as pltpu


def _linear_point_kernel(xT_ref, w_ref, b_ref, oT_ref):
    # xT_ref: (3, TM)        lane-dense input slab (lane axis = flattened batch)
    # w_ref : (d_model, 3)   tiny weight, resident every grid step
    # b_ref : (d_model, 1)
    # oT_ref: (d_model, TM)  lane-dense output slab
    x0 = xT_ref[0:1, :]            # (1, TM)
    x1 = xT_ref[1:2, :]
    x2 = xT_ref[2:3, :]
    acc = (
        w_ref[:, 0:1] * x0         # (d_model, 1) * (1, TM) -> (d_model, TM) on the VPU
        + w_ref[:, 1:2] * x1
        + w_ref[:, 2:3] * x2
        + b_ref[...]
    )
    oT_ref[...] = acc.astype(oT_ref.dtype)


def _round_up(v, mult):
    return ((v + mult - 1) // mult) * mult


def upmodle_point_forward(x, weight, bias, *, tm_max=2048):
    """Forward of nn.Linear(3, d_model).

    x: (..., 3) float32; weight: (d_model, 3) (PyTorch layout); bias: (d_model,).
    Returns (..., d_model).
    """
    *lead, k = x.shape
    d_model, k_w = weight.shape
    assert k == 3 and k_w == 3

    m = 1
    for s in lead:
        m *= s

    # Tile size: multiple of 128 (lane width), capped for VMEM headroom on v7x.
    tm = min(tm_max, _round_up(max(m, 1), 128))
    m_pad = _round_up(max(m, 1), tm)

    xT = x.reshape(m, 3).T                      # (3, m): cheap, m*12 bytes
    if m_pad != m:
        xT = jnp.pad(xT, ((0, 0), (0, m_pad - m)))
    b2 = bias.reshape(d_model, 1)

    grid = (m_pad // tm,)

    outT = pl.pallas_call(
        _linear_point_kernel,
        out_shape=jax.ShapeDtypeStruct((d_model, m_pad), x.dtype),
        grid_spec=pltpu.PrefetchScalarGridSpec(
            num_scalar_prefetch=0,
            grid=grid,
            in_specs=[
                pl.BlockSpec((3, tm), lambda i: (0, i)),
                pl.BlockSpec((d_model, 3), lambda i: (0, 0)),
                pl.BlockSpec((d_model, 1), lambda i: (0, 0)),
            ],
            out_specs=pl.BlockSpec((d_model, tm), lambda i: (0, i)),
        ),
        compiler_params=pltpu.CompilerParams(
            # Independent M tiles: shardable across v7x's 2 TCs, harmless elsewhere.
            dimension_semantics=("parallel",),
        ),
    )(xT, weight, b2)

    out = outT[:, :m].T                         # drop padding, back to (m, d_model)
    return out.reshape(*lead, d_model)


if __name__ == "__main__":
    d_model = 32
    key = jax.random.PRNGKey(0)
    kx, kw, kb = jax.random.split(key, 3)

    # Deterministic parameter init mimicking nn.Linear(3, d_model):
    # uniform(-1/sqrt(in_features), 1/sqrt(in_features))
    bound = 1.0 / jnp.sqrt(3.0)
    weight = jax.random.uniform(kw, (d_model, 3), jnp.float32, -bound, bound)
    bias = jax.random.uniform(kb, (d_model,), jnp.float32, -bound, bound)

    # Example input: batch=2, seq=8, last dim = 3 (as Linear(3, .) implies)
    x = jax.random.normal(kx, (2, 8, 3), jnp.float32)

    y = upmodle_point_forward(x, weight, bias)
    jax.block_until_ready(y)

    # Reference check against plain JAX (same math as torch's x @ W.T + b)
    y_ref = x @ weight.T + bias
    assert y.shape == (2, 8, d_model)
    assert jnp.allclose(y, y_ref, atol=1e-5, rtol=1e-5)

    print("KERNEL_OK")
</pallas_src>

<mosaic_0001>
module attributes {stable_mosaic.version = 11 : i64} {
  func.func @_linear_point_kernel(%arg0: i32, %arg1: memref<3x128xf32, #tpu.memory_space<vmem>>, %arg2: memref<32x3xf32, #tpu.memory_space<vmem>>, %arg3: memref<32x1xf32, #tpu.memory_space<vmem>>, %arg4: memref<32x128xf32, #tpu.memory_space<vmem>>) attributes {dimension_semantics = [#tpu.dimension_semantics<parallel>], iteration_bounds = array<i64: 1>, scalar_prefetch = 0 : i64, scratch_operands = 0 : i64, tpu.core_type = #tpu.core_type<tc>, window_params = [{transform_indices = @transform_0, window_bounds = array<i64: 3, 128>}, {pipeline_mode = #tpu.pipeline_mode<synchronous>, transform_indices = @transform_1, window_bounds = array<i64: 32, 3>}, {pipeline_mode = #tpu.pipeline_mode<synchronous>, transform_indices = @transform_2, window_bounds = array<i64: 32, 1>}, {transform_indices = @transform_3, window_bounds = array<i64: 32, 128>}]} {
    %c0 = arith.constant 0 : index
    %c0_0 = arith.constant 0 : index
    %0 = vector.load %arg1[%c0, %c0_0] : memref<3x128xf32, #tpu.memory_space<vmem>>, vector<1x128xf32>
    %c1 = arith.constant 1 : index
    %c0_1 = arith.constant 0 : index
    %1 = vector.load %arg1[%c1, %c0_1] : memref<3x128xf32, #tpu.memory_space<vmem>>, vector<1x128xf32>
    %c2 = arith.constant 2 : index
    %c0_2 = arith.constant 0 : index
    %2 = vector.load %arg1[%c2, %c0_2] : memref<3x128xf32, #tpu.memory_space<vmem>>, vector<1x128xf32>
    %c0_3 = arith.constant 0 : index
    %c0_4 = arith.constant 0 : index
    %3 = vector.load %arg2[%c0_3, %c0_4] : memref<32x3xf32, #tpu.memory_space<vmem>>, vector<32x1xf32>
    %4 = vector.broadcast %3 : vector<32x1xf32> to vector<32x128xf32>
    %5 = vector.broadcast %0 : vector<1x128xf32> to vector<32x128xf32>
    %6 = arith.mulf %4, %5 : vector<32x128xf32>
    %c0_5 = arith.constant 0 : index
    %c1_6 = arith.constant 1 : index
    %7 = vector.load %arg2[%c0_5, %c1_6] : memref<32x3xf32, #tpu.memory_space<vmem>>, vector<32x1xf32>
    %8 = vector.broadcast %7 : vector<32x1xf32> to vector<32x128xf32>
    %9 = vector.broadcast %1 : vector<1x128xf32> to vector<32x128xf32>
    %10 = arith.mulf %8, %9 : vector<32x128xf32>
    %11 = arith.addf %6, %10 : vector<32x128xf32>
    %c0_7 = arith.constant 0 : index
    %c2_8 = arith.constant 2 : index
    %12 = vector.load %arg2[%c0_7, %c2_8] : memref<32x3xf32, #tpu.memory_space<vmem>>, vector<32x1xf32>
    %13 = vector.broadcast %12 : vector<32x1xf32> to vector<32x128xf32>
    %14 = vector.broadcast %2 : vector<1x128xf32> to vector<32x128xf32>
    %15 = arith.mulf %13, %14 : vector<32x128xf32>
    %16 = arith.addf %11, %15 : vector<32x128xf32>
    %c0_9 = arith.constant 0 : index
    %c0_10 = arith.constant 0 : index
    %17 = vector.load %arg3[%c0_9, %c0_10] : memref<32x1xf32, #tpu.memory_space<vmem>>, vector<32x1xf32>
    %18 = vector.broadcast %17 : vector<32x1xf32> to vector<32x128xf32>
    %19 = arith.addf %16, %18 : vector<32x128xf32>
    %c0_11 = arith.constant 0 : index
    %c0_12 = arith.constant 0 : index
    %20 = vector.load %arg4[%c0_11, %c0_12] : memref<32x128xf32, #tpu.memory_space<vmem>>, vector<32x128xf32>
    tpu.vector_store %arg4[%c0_11, %c0_12], %19 {strides = array<i32>} : memref<32x128xf32, #tpu.memory_space<vmem>>, vector<32x128xf32>,
    return
  }
  func.func @transform_0(%arg0: i32) -> (i32, i32) {
    %c0_i32 = arith.constant 0 : i32
    %c0_i32_0 = arith.constant 0 : i32
    return %c0_i32, %arg0 : i32, i32
  }
  func.func @transform_1(%arg0: i32) -> (i32, i32) {
    %c0_i32 = arith.constant 0 : i32
    %c0_i32_0 = arith.constant 0 : i32
    %c0_i32_1 = arith.constant 0 : i32
    return %c0_i32, %c0_i32_0 : i32, i32
  }
  func.func @transform_2(%arg0: i32) -> (i32, i32) {
    %c0_i32 = arith.constant 0 : i32
    %c0_i32_0 = arith.constant 0 : i32
    %c0_i32_1 = arith.constant 0 : i32
    return %c0_i32, %c0_i32_0 : i32, i32
  }
  func.func @transform_3(%arg0: i32) -> (i32, i32) {
    %c0_i32 = arith.constant 0 : i32
    %c0_i32_0 = arith.constant 0 : i32
    return %c0_i32, %arg0 : i32, i32
  }
}

</mosaic_0001>

<llo_original>
// kernel: tpu_custom_call.1
$region0: #{tpu_custom_call.1}
  #allocation0 [shape = 'u32[]', space=smem, size = 0x4, offset = 0x4, fixed_abs, tag = 'smem constant byte address 0x4 - core index']
  #allocation1 [shape = 'u32[144,128]{1,0:T(1,128)}', space=vmem, size = 0x12000, scoped, tag = 'internal scratch']
  %s0 = inlined_call_operand.vmem [shape: f32[3,128], index: 0, kind: input, shape index: {}]
  %s1 = inlined_call_operand.vmem [shape: f32[32,3], index: 1, kind: input, shape index: {}]
  %s2 = inlined_call_operand.vmem [shape: f32[32,1], index: 2, kind: input, shape index: {}]
  %s3 = inlined_call_operand.hbm [shape: f32[32,128], index: 3, kind: output, shape index: {}]
  %s4 = sld [smem:[#allocation0]]
  $region22: #{tpu_custom_call.1} parent=0
    _
  %s6 = ssub.s32 1, %s4
  %s7 = scalar_select 0, %s6, %s4
  $region1: #{tpu_custom_call.1} parent=0
    #allocation2 [shape = 'u8[16384]{0}', space=vmem, size = 0x4000, scoped, tag = 'output window, operand 0, single buffered']
    #allocation3 [shape = 's32[1]{0}', space=sflag, size = 0x4, scoped, tag = 'scoped memory for tpu_custom_call.1']
    %8 = vsyncpa [#allocation3], 0
    // Predicated region
    $region2: #{tpu_custom_call.1} parent=1 // pred_check
      _
    $region3: #{tpu_custom_call.1} parent=1 // pred_check_branch
      %10 = sbr.rel (0) target = $region5
    $region4: #{tpu_custom_call.1} parent=1 // pred_region
      _
    $region5: #{tpu_custom_call.1} parent=1 // pred_fallthru
      _
    // Predicated region
    $region6: #{tpu_custom_call.1} parent=1 // pred_check
      _
    $region7: #{tpu_custom_call.1} parent=1 // pred_check_branch
      %12 = sbr.rel (0) target = $region9
    $region8: #{tpu_custom_call.1} parent=1 // pred_region
      _
    $region9: #{tpu_custom_call.1} parent=1 // pred_fallthru
      _
    // Predicated region
    $region10: #{tpu_custom_call.1} parent=1 // pred_check
      _
    $region11: #{tpu_custom_call.1} parent=1 // pred_check_branch
      %14 = sbr.rel (0) target = $region13
    $region12: #{tpu_custom_call.1} parent=1 // pred_region
      _
    $region13: #{tpu_custom_call.1} parent=1 // pred_fallthru
      _
    %v15 = vld [vmem:[%s0] sm:$0x1]
    %v16 = vld [vmem:[%s0 + $0x1] sm:$0x1]
    %v17 = vld [vmem:[%s0 + $0x2] sm:$0x1]
    %v18 = vld [vmem:[%s1] sm:$0xff]
    %v19 = vld [vmem:[%s1 + $0x8] sm:$0xff]
    %v20 = vld [vmem:[%s1 + $0x10] sm:$0xff]
    %v21 = vld [vmem:[%s1 + $0x18] sm:$0xff]
    %23 = vset.pattern.permute.xlu0 0
    %24 = vperm.xlu0 %23, %v18
    %v25 = vpop.permute.xlu0 %24
    %28 = vset.pattern.permute.xlu0 0
    %29 = vperm.xlu0 %28, %v19
    %v30 = vpop.permute.xlu0 %29
    %33 = vset.pattern.permute.xlu0 0
    %34 = vperm.xlu0 %33, %v20
    %v35 = vpop.permute.xlu0 %34
    %38 = vset.pattern.permute.xlu0 0
    %39 = vperm.xlu0 %38, %v21
    %v40 = vpop.permute.xlu0 %39
    %v42 = vlaneseq
    %v43 = vshrl.u32 %v42, 7
    %v44 = vsub.s32 0, %v43
    %v45 = vrot.slane %v15, %v44
    %v46 = vmul.f32 %v25, %v45
    %v47 = vmul.f32 %v30, %v45
    %v48 = vmul.f32 %v35, %v45
    %v49 = vmul.f32 %v40, %v45
    %50 = vset.pattern.permute.xlu0 1
    %51 = vperm.xlu0 %50, %v18
    %v52 = vpop.permute.xlu0 %51
    %54 = vset.pattern.permute.xlu0 1
    %55 = vperm.xlu0 %54, %v19
    %v56 = vpop.permute.xlu0 %55
    %58 = vset.pattern.permute.xlu0 1
    %59 = vperm.xlu0 %58, %v20
    %v60 = vpop.permute.xlu0 %59
    %62 = vset.pattern.permute.xlu0 1
    %63 = vperm.xlu0 %62, %v21
    %v64 = vpop.permute.xlu0 %63
    %v66 = vlaneseq
    %v67 = vshrl.u32 %v66, 7
    %v68 = vsub.s32 0, %v67
    %v69 = vrot.slane %v16, %v68
    %v70 = vmul.f32 %v52, %v69
    %v71 = vmul.f32 %v56, %v69
    %v72 = vmul.f32 %v60, %v69
    %v73 = vmul.f32 %v64, %v69
    %v74 = vadd.f32 %v46, %v70
    %v75 = vadd.f32 %v47, %v71
    %v76 = vadd.f32 %v48, %v72
    %v77 = vadd.f32 %v49, %v73
    %78 = vset.pattern.permute.xlu0 2
    %79 = vperm.xlu0 %78, %v18
    %v80 = vpop.permute.xlu0 %79
    %82 = vset.pattern.permute.xlu0 2
    %83 = vperm.xlu0 %82, %v19
    %v84 = vpop.permute.xlu0 %83
    %86 = vset.pattern.permute.xlu0 2
    %87 = vperm.xlu0 %86, %v20
    %v88 = vpop.permute.xlu0 %87
    %90 = vset.pattern.permute.xlu0 2
    %91 = vperm.xlu0 %90, %v21
    %v92 = vpop.permute.xlu0 %91
    %v94 = vlaneseq
    %v95 = vshrl.u32 %v94, 7
    %v96 = vsub.s32 0, %v95
    %v97 = vrot.slane %v17, %v96
    %v98 = vmul.f32 %v80, %v97
    %v99 = vmul.f32 %v84, %v97
    %v100 = vmul.f32 %v88, %v97
    %v101 = vmul.f32 %v92, %v97
    %v102 = vadd.f32 %v74, %v98
    %v103 = vadd.f32 %v75, %v99
    %v104 = vadd.f32 %v76, %v100
    %v105 = vadd.f32 %v77, %v101
    %v106 = vld [vmem:[%s2] sm:$0xff]
    %v107 = vld [vmem:[%s2 + $0x8] sm:$0xff]
    %v108 = vld [vmem:[%s2 + $0x10] sm:$0xff]
    %v109 = vld [vmem:[%s2 + $0x18] sm:$0xff]
    %111 = vset.pattern.permute.xlu0 0
    %112 = vperm.xlu0 %111, %v106
    %v113 = vpop.permute.xlu0 %112
    %116 = vset.pattern.permute.xlu0 0
    %117 = vperm.xlu0 %116, %v107
    %v118 = vpop.permute.xlu0 %117
    %121 = vset.pattern.permute.xlu0 0
    %122 = vperm.xlu0 %121, %v108
    %v123 = vpop.permute.xlu0 %122
    %126 = vset.pattern.permute.xlu0 0
    %127 = vperm.xlu0 %126, %v109
    %v128 = vpop.permute.xlu0 %127
    %v130 = vadd.f32 %v102, %v113
    %v131 = vadd.f32 %v103, %v118
    %v132 = vadd.f32 %v104, %v123
    %v133 = vadd.f32 %v105, %v128
    %134 = vst [vmem:[#allocation2] sm:$0xff] %v130
    %135 = vst [vmem:[#allocation2 + $0x8] sm:$0xff] %v131
    %136 = vst [vmem:[#allocation2 + $0x10] sm:$0xff] %v132
    %137 = vst [vmem:[#allocation2 + $0x18] sm:$0xff] %v133
    // Predicated region
    $region14: #{tpu_custom_call.1} parent=1 // pred_check
      _
    $region15: #{tpu_custom_call.1} parent=1 // pred_check_branch
      %139 = sbr.rel (0) target = $region17
    $region16: #{tpu_custom_call.1} parent=1 // pred_region
      %s141 = ssub.s32 512, 512
      %142 = vsyncadd [#allocation3], %s141
      %s143 = sshll.u32 [#allocation2], 4
      %s144 = int_to_ptr.vmem [resolvable:$true] %s143
      %149 = dma.vmem_to_hbm [thread:$0]  %s144, 512, %s3, [#allocation3], 128, 128, 8
    $region17: #{tpu_custom_call.1} parent=1 // pred_fallthru
      _
    // Predicated region
    $region18: #{tpu_custom_call.1} parent=1 // pred_check
      _
    $region19: #{tpu_custom_call.1} parent=1 // pred_check_branch
      %151 = sbr.rel (0) target = $region21
    $region20: #{tpu_custom_call.1} parent=1 // pred_region
      %152 = dma.done [#allocation3], 512
    $region21: #{tpu_custom_call.1} parent=1 // pred_fallthru
      _
    %153 = vsyncpa [#allocation3], 1

</llo_original>
